<compile_context>
chip_gen: v6e
topology: v6e:2x2x1
jax: 0.10.0
libtpu: 0.0.40
codegen_flags: <defaults>
</compile_context>

<pallas_src>
import jax
import jax.numpy as jnp
from jax.experimental import pallas as pl
from jax.experimental.pallas import tpu as pltpu


def _mean_pool_kernel(x_ref, m_ref, denom_ref, o_ref):
    # x_ref: (TB, TS, TH)  m_ref: (TB, TS)  denom_ref: (TB, 1) f32
    # o_ref: (TB, TH) f32 -- resident across the sequence axis, used as accumulator.
    s = pl.program_id(2)

    @pl.when(s == 0)
    def _init():
        o_ref[...] = jnp.zeros_like(o_ref)

    x = x_ref[...].astype(jnp.float32)          # (TB, TS, TH)
    m = m_ref[...].astype(jnp.float32)          # (TB, TS), matches torch's .float() mask
    # VPU path: mask broadcast over lanes, masked sum over the sequence tile in f32.
    o_ref[...] += jnp.sum(x * m[:, :, None], axis=1)

    @pl.when(s == pl.num_programs(2) - 1)
    def _finalize():
        o_ref[...] = o_ref[...] / denom_ref[...]   # (TB, 1) broadcast over TH lanes


def _hardware_params():
    """VMEM-capacity-based per-generation sizing, with a conservative fallback."""
    try:
        vmem_cap = int(pltpu.get_tpu_info().vmem_capacity_bytes)
    except Exception:
        vmem_cap = 64 << 20                    # assume the smallest (v7x-like) VMEM
    small_vmem = vmem_cap < (100 << 20)        # v7x-like: 64 MiB VMEM, 2 TensorCores
    x_budget = (8 << 20) if small_vmem else (12 << 20)
    vmem_limit = int(min(vmem_cap * 0.70, 96 << 20))
    return x_budget, vmem_limit, small_vmem


def _choose_tiles(B_pad, S, H, itemsize, x_budget, small_vmem):
    """Pick (TB, TS, TH, S_pad) respecting the (8,128) block rules and the x budget."""
    TB = 8                                     # B_pad is always a multiple of 8

    # Hidden tile: full H unless H is large; keep TH >= 512 so each contiguous HBM
    # run of the strided x DMA stays >= 1-2 KiB.
    TH = H
    if H % 128 == 0 and H > 2048:
        for cand in (2048, 1024, 512):
            if H % cand == 0:
                TH = cand
                break

    # On 2-TensorCore parts make sure there are >= 2 parallel (b, h) blocks.
    if small_vmem and (B_pad // TB) * (H // TH) < 2 and TH % 256 == 0:
        TH //= 2

    # Sequence tile: full S if it fits the budget, otherwise the largest multiple of
    # 128 that does (S is then zero-padded up to a multiple of TS).
    if TB * S * TH * itemsize <= x_budget:
        TS = S
    else:
        TS = max(128, (x_budget // (TB * TH * itemsize)) // 128 * 128)
    S_pad = pl.cdiv(S, TS) * TS
    return TB, TS, TH, S_pad


def mean_pooling(last_hidden_state: jax.Array, attention_mask: jax.Array) -> jax.Array:
    """Masked mean pooling. last_hidden_state: (B, S, H); attention_mask: (B, S)."""
    B, S, H = last_hidden_state.shape
    assert attention_mask.shape == (B, S)

    # Denominator hoisted out of the kernel: exact count on the *unpadded* mask,
    # clamped like torch.clamp(min=1e-9).
    denom = jnp.maximum(
        attention_mask.astype(jnp.float32).sum(axis=1, keepdims=True), 1e-9
    )

    x_budget, vmem_limit, small_vmem = _hardware_params()
    itemsize = last_hidden_state.dtype.itemsize

    B_pad = ((B + 7) // 8) * 8
    TB, TS, TH, S_pad = _choose_tiles(B_pad, S, H, itemsize, x_budget, small_vmem)

    x = last_hidden_state
    mask = attention_mask
    if (B_pad, S_pad) != (B, S):
        x = jnp.pad(x, ((0, B_pad - B), (0, S_pad - S), (0, 0)))
        mask = jnp.pad(mask, ((0, B_pad - B), (0, S_pad - S)))
    if B_pad != B:
        denom = jnp.pad(denom, ((0, B_pad - B), (0, 0)), constant_values=1.0)

    grid = (B_pad // TB, H // TH, S_pad // TS)

    # Triple-buffer the x stream on short-step (v7x-like) parts when there are enough
    # sequence steps to overlap DMA-issue jitter.
    if small_vmem and grid[2] >= 3:
        x_spec = pl.BlockSpec((TB, TS, TH), lambda b, h, s: (b, s, h),
                              pipeline_mode=pl.Buffered(3))
    else:
        x_spec = pl.BlockSpec((TB, TS, TH), lambda b, h, s: (b, s, h))

    cost = pl.CostEstimate(
        flops=2 * B_pad * S_pad * H,
        transcendentals=0,
        bytes_accessed=(
            B_pad * S_pad * H * itemsize
            + B_pad * S_pad * attention_mask.dtype.itemsize
            + B_pad * 4
            + B_pad * H * 4
        ),
    )

    out = pl.pallas_call(
        _mean_pool_kernel,
        out_shape=jax.ShapeDtypeStruct((B_pad, H), jnp.float32),
        grid_spec=pltpu.PrefetchScalarGridSpec(
            num_scalar_prefetch=0,
            grid=grid,
            in_specs=[
                x_spec,
                pl.BlockSpec((TB, TS), lambda b, h, s: (b, s)),
                pl.BlockSpec((TB, 1), lambda b, h, s: (b, 0)),
            ],
            out_specs=pl.BlockSpec((TB, TH), lambda b, h, s: (b, h)),
        ),
        compiler_params=pltpu.CompilerParams(
            dimension_semantics=("parallel", "parallel", "arbitrary"),
            vmem_limit_bytes=vmem_limit,
        ),
        cost_estimate=cost,
    )(x, mask, denom)

    return out[:B] if B_pad != B else out


def mean_pooling_ref(last_hidden_state, attention_mask):
    """Pure-JAX reference mirroring the PyTorch forward."""
    mask = attention_mask[..., None].astype(jnp.float32)            # (B, S, 1)
    mask_expanded = jnp.broadcast_to(mask, last_hidden_state.shape)
    sum_embeddings = jnp.sum(
        last_hidden_state.astype(jnp.float32) * mask_expanded, axis=1
    )
    sum_mask = jnp.maximum(jnp.sum(mask_expanded, axis=1), 1e-9)
    return sum_embeddings / sum_mask


if __name__ == "__main__":
    key = jax.random.PRNGKey(0)
    k1, k2 = jax.random.split(key)

    B, S, H = 2, 8, 32
    last_hidden_state = jax.random.normal(k1, (B, S, H), dtype=jnp.float32)
    # 0/1 attention mask (int32, like typical tokenizer output)
    attention_mask = (jax.random.uniform(k2, (B, S)) > 0.3).astype(jnp.int32)

    out = mean_pooling(last_hidden_state, attention_mask)
    out = jax.block_until_ready(out)

    ref = mean_pooling_ref(last_hidden_state, attention_mask)
    assert out.shape == (B, H)
    assert jnp.allclose(out, ref, atol=1e-5, rtol=1e-5), "mismatch vs reference"

    print("KERNEL_OK")
</pallas_src>

<mosaic_0001>
module attributes {stable_mosaic.version = 11 : i64} {
  func.func @_mean_pool_kernel(%arg0: i32, %arg1: i32, %arg2: i32, %arg3: memref<8x8x32xf32, #tpu.memory_space<vmem>>, %arg4: memref<8x8xi32, #tpu.memory_space<vmem>>, %arg5: memref<8x1xf32, #tpu.memory_space<vmem>>, %arg6: memref<8x32xf32, #tpu.memory_space<vmem>>) attributes {dimension_semantics = [#tpu.dimension_semantics<parallel>, #tpu.dimension_semantics<parallel>, #tpu.dimension_semantics<arbitrary>], iteration_bounds = array<i64: 1, 1, 1>, scalar_prefetch = 0 : i64, scratch_operands = 0 : i64, tpu.core_type = #tpu.core_type<tc>, window_params = [{transform_indices = @transform_0, window_bounds = array<i64: 8, 8, 32>}, {transform_indices = @transform_1, window_bounds = array<i64: 8, 8>}, {transform_indices = @transform_2, window_bounds = array<i64: 8, 1>}, {transform_indices = @transform_3, window_bounds = array<i64: 8, 32>}]} {
    %c0_i32 = arith.constant 0 : i32
    %0 = arith.cmpi eq, %arg2, %c0_i32 : i32
    %1 = arith.extui %0 : i1 to i32
    %c0_i32_0 = arith.constant 0 : i32
    %2 = arith.cmpi ne, %1, %c0_i32_0 : i32
    scf.if %2 {
      %cst_11 = arith.constant 0.000000e+00 : f32
      %16 = vector.broadcast %cst_11 : f32 to vector<8x32xf32>
      %c0_12 = arith.constant 0 : index
      %c0_13 = arith.constant 0 : index
      %17 = vector.load %arg6[%c0_12, %c0_13] : memref<8x32xf32, #tpu.memory_space<vmem>>, vector<8x32xf32>
      tpu.vector_store %arg6[%c0_12, %c0_13], %16 {strides = array<i32>} : memref<8x32xf32, #tpu.memory_space<vmem>>, vector<8x32xf32>,
    } else {
    }
    %c0 = arith.constant 0 : index
    %c0_1 = arith.constant 0 : index
    %c0_2 = arith.constant 0 : index
    %3 = vector.load %arg3[%c0, %c0_1, %c0_2] : memref<8x8x32xf32, #tpu.memory_space<vmem>>, vector<8x8x32xf32>
    %c0_3 = arith.constant 0 : index
    %c0_4 = arith.constant 0 : index
    %4 = vector.load %arg4[%c0_3, %c0_4] : memref<8x8xi32, #tpu.memory_space<vmem>>, vector<8x8xi32>
    %5 = arith.sitofp %4 : vector<8x8xi32> to vector<8x8xf32>
    %c0_5 = arith.constant 0 : index
    %c0_6 = arith.constant 0 : index
    %6 = vector.load %arg6[%c0_5, %c0_6] : memref<8x32xf32, #tpu.memory_space<vmem>>, vector<8x32xf32>
    %7 = vector.shape_cast %5 : vector<8x8xf32> to vector<8x8x1xf32>
    %8 = vector.broadcast %7 : vector<8x8x1xf32> to vector<8x8x32xf32>
    %9 = arith.mulf %3, %8 : vector<8x8x32xf32>
    %cst = arith.constant dense<0.000000e+00> : vector<8x32xf32>
    %10 = vector.multi_reduction <add>, %9, %cst [1] : vector<8x8x32xf32> to vector<8x32xf32>
    %11 = arith.addf %6, %10 : vector<8x32xf32>
    %c0_7 = arith.constant 0 : index
    %c0_8 = arith.constant 0 : index
    %12 = vector.load %arg6[%c0_7, %c0_8] : memref<8x32xf32, #tpu.memory_space<vmem>>, vector<8x32xf32>
    tpu.vector_store %arg6[%c0_7, %c0_8], %11 {strides = array<i32>} : memref<8x32xf32, #tpu.memory_space<vmem>>, vector<8x32xf32>,
    %c0_i32_9 = arith.constant 0 : i32
    %13 = arith.cmpi eq, %arg2, %c0_i32_9 : i32
    %14 = arith.extui %13 : i1 to i32
    %c0_i32_10 = arith.constant 0 : i32
    %15 = arith.cmpi ne, %14, %c0_i32_10 : i32
    scf.if %15 {
      %c0_11 = arith.constant 0 : index
      %c0_12 = arith.constant 0 : index
      %16 = vector.load %arg6[%c0_11, %c0_12] : memref<8x32xf32, #tpu.memory_space<vmem>>, vector<8x32xf32>
      %c0_13 = arith.constant 0 : index
      %c0_14 = arith.constant 0 : index
      %17 = vector.load %arg5[%c0_13, %c0_14] : memref<8x1xf32, #tpu.memory_space<vmem>>, vector<8x1xf32>
      %18 = vector.broadcast %17 : vector<8x1xf32> to vector<8x32xf32>
      %19 = arith.divf %16, %18 : vector<8x32xf32>
      %c0_15 = arith.constant 0 : index
      %c0_16 = arith.constant 0 : index
      %20 = vector.load %arg6[%c0_15, %c0_16] : memref<8x32xf32, #tpu.memory_space<vmem>>, vector<8x32xf32>
      tpu.vector_store %arg6[%c0_15, %c0_16], %19 {strides = array<i32>} : memref<8x32xf32, #tpu.memory_space<vmem>>, vector<8x32xf32>,
    } else {
    }
    return
  }
  func.func @transform_0(%arg0: i32, %arg1: i32, %arg2: i32) -> (i32, i32, i32) {
    %c0_i32 = arith.constant 0 : i32
    return %arg0, %arg2, %arg1 : i32, i32, i32
  }
  func.func @transform_1(%arg0: i32, %arg1: i32, %arg2: i32) -> (i32, i32) {
    %c0_i32 = arith.constant 0 : i32
    return %arg0, %arg2 : i32, i32
  }
  func.func @transform_2(%arg0: i32, %arg1: i32, %arg2: i32) -> (i32, i32) {
    %c0_i32 = arith.constant 0 : i32
    %c0_i32_0 = arith.constant 0 : i32
    return %arg0, %c0_i32 : i32, i32
  }
  func.func @transform_3(%arg0: i32, %arg1: i32, %arg2: i32) -> (i32, i32) {
    %c0_i32 = arith.constant 0 : i32
    return %arg0, %arg1 : i32, i32
  }
}

</mosaic_0001>

<llo_original>
// kernel: tpu_custom_call.1
$region0: #{tpu_custom_call.1}
  #allocation0 [shape = 'u32[]', space=smem, size = 0x4, offset = 0x4, fixed_abs, tag = 'smem constant byte address 0x4 - core index']
  #allocation1 [shape = 'u32[144,128]{1,0:T(1,128)}', space=vmem, size = 0x12000, scoped, tag = 'internal scratch']
  %s0 = inlined_call_operand.hbm [shape: f32[8,8,32], index: 0, kind: input, shape index: {}]
  %s1 = inlined_call_operand.vmem [shape: s32[8,8], index: 1, kind: input, shape index: {}]
  %s2 = inlined_call_operand.vmem [shape: f32[8,1], index: 2, kind: input, shape index: {}]
  %s3 = inlined_call_operand.hbm [shape: f32[8,32], index: 3, kind: output, shape index: {}]
  %s4 = sld [smem:[#allocation0]]
  $region34: #{tpu_custom_call.1} parent=0
    _
  %s6 = ssub.s32 1, %s4
  %s7 = scalar_select 0, %s6, %s4
  $region1: #{tpu_custom_call.1} parent=0
    #allocation2 [shape = 'u8[32768]{0}', space=vmem, size = 0x8000, scoped, tag = 'input window, operand 0, single buffered']
    #allocation3 [shape = 's32[1]{0}', space=sflag, size = 0x4, scoped, tag = 'scoped memory for tpu_custom_call.1']
    #allocation4 [shape = 's32[1]{0}', space=sflag, size = 0x4, scoped, tag = 'scoped memory for tpu_custom_call.1']
    #allocation5 [shape = 'u8[4096]{0}', space=vmem, size = 0x1000, scoped, tag = 'output window, operand 0, single buffered']
    %8 = vsyncpa [#allocation3], 0
    %9 = vsyncpa [#allocation4], 0
    // Predicated region
    $region2: #{tpu_custom_call.1} parent=1 // pred_check
      _
    $region3: #{tpu_custom_call.1} parent=1 // pred_check_branch
      %11 = sbr.rel (0) target = $region5
    $region4: #{tpu_custom_call.1} parent=1 // pred_region
      %s13 = ssub.s32 1024, 1024
      %14 = vsyncadd [#allocation3], %s13
      %s15 = sshll.u32 [#allocation2], 4
      %s16 = int_to_ptr.vmem [resolvable:$true] %s15
      %21 = dma.hbm_to_vmem [thread:$0]  %s0, 1024, %s16, [#allocation3], 128, 128, 8
    $region5: #{tpu_custom_call.1} parent=1 // pred_fallthru
      _
    // Predicated region
    $region6: #{tpu_custom_call.1} parent=1 // pred_check
      _
    $region7: #{tpu_custom_call.1} parent=1 // pred_check_branch
      %23 = sbr.rel (0) target = $region9
    $region8: #{tpu_custom_call.1} parent=1 // pred_region
      _
    $region9: #{tpu_custom_call.1} parent=1 // pred_fallthru
      _
    // Predicated region
    $region10: #{tpu_custom_call.1} parent=1 // pred_check
      _
    $region11: #{tpu_custom_call.1} parent=1 // pred_check_branch
      %25 = sbr.rel (0) target = $region13
    $region12: #{tpu_custom_call.1} parent=1 // pred_region
      _
    $region13: #{tpu_custom_call.1} parent=1 // pred_fallthru
      _
    // Predicated region
    $region14: #{tpu_custom_call.1} parent=1 // pred_check
      _
    $region15: #{tpu_custom_call.1} parent=1 // pred_check_branch
      %27 = sbr.rel (0) target = $region17
    $region16: #{tpu_custom_call.1} parent=1 // pred_region
      %28 = dma.done [#allocation3], 1024
    $region17: #{tpu_custom_call.1} parent=1 // pred_fallthru
      _
    %p29 = scmp.eq.s32.totalorder 0, 0
    // Predicated region
    $region18: #{tpu_custom_call.1} parent=1 // pred_check
      %p30 = pneg %p29
    $region19: #{tpu_custom_call.1} parent=1 // pred_check_branch
      %32 = sbr.rel (%p30) target = $region21
    $region20: #{tpu_custom_call.1} parent=1 // pred_region
      %vm33 = vcmask 261120
      %34 = vst.msk [vmem:[#allocation5] sm:$0xff] %vm33, 0.0
    $region21: #{tpu_custom_call.1} parent=1 // pred_fallthru
      _
    %v35 = vld [vmem:[#allocation2] sm:$0xff]
    %v36 = vld [vmem:[#allocation2 + $0x8] sm:$0xff]
    %v37 = vld [vmem:[#allocation2 + $0x10] sm:$0xff]
    %v38 = vld [vmem:[#allocation2 + $0x18] sm:$0xff]
    %v39 = vld [vmem:[#allocation2 + $0x20] sm:$0xff]
    %v40 = vld [vmem:[#allocation2 + $0x28] sm:$0xff]
    %v41 = vld [vmem:[#allocation2 + $0x30] sm:$0xff]
    %v42 = vld [vmem:[#allocation2 + $0x38] sm:$0xff]
    %v43 = vld [vmem:[%s1] sm:$0xff]
    %v44 = vcvt.s32.f32 %v43
    %v45 = vld [vmem:[#allocation5] sm:$0xff]
    %v46 = vlaneseq
    %v47 = vshrl.u32 %v46, 7
    %v48 = vsub.s32 0, %v47
    %v49 = vrot.slane %v44, %v48
    %51 = vbcast.lane.b32.xlu0 %v49, 256
    %v52 = vpop.permute.xlu0 %51
    %v53 = vlaneseq
    %v54 = vshrl.u32 %v53, 7
    %v55 = vsub.s32 1, %v54
    %v56 = vrot.slane %v44, %v55
    %58 = vbcast.lane.b32.xlu0 %v56, 256
    %v59 = vpop.permute.xlu0 %58
    %v60 = vlaneseq
    %v61 = vshrl.u32 %v60, 7
    %v62 = vsub.s32 2, %v61
    %v63 = vrot.slane %v44, %v62
    %65 = vbcast.lane.b32.xlu0 %v63, 256
    %v66 = vpop.permute.xlu0 %65
    %v67 = vlaneseq
    %v68 = vshrl.u32 %v67, 7
    %v69 = vsub.s32 3, %v68
    %v70 = vrot.slane %v44, %v69
    %72 = vbcast.lane.b32.xlu0 %v70, 256
    %v73 = vpop.permute.xlu0 %72
    %v74 = vlaneseq
    %v75 = vshrl.u32 %v74, 7
    %v76 = vsub.s32 4, %v75
    %v77 = vrot.slane %v44, %v76
    %79 = vbcast.lane.b32.xlu0 %v77, 256
    %v80 = vpop.permute.xlu0 %79
    %v81 = vlaneseq
    %v82 = vshrl.u32 %v81, 7
    %v83 = vsub.s32 5, %v82
    %v84 = vrot.slane %v44, %v83
    %86 = vbcast.lane.b32.xlu0 %v84, 256
    %v87 = vpop.permute.xlu0 %86
    %v88 = vlaneseq
    %v89 = vshrl.u32 %v88, 7
    %v90 = vsub.s32 6, %v89
    %v91 = vrot.slane %v44, %v90
    %93 = vbcast.lane.b32.xlu0 %v91, 256
    %v94 = vpop.permute.xlu0 %93
    %v95 = vlaneseq
    %v96 = vshrl.u32 %v95, 7
    %v97 = vsub.s32 7, %v96
    %v98 = vrot.slane %v44, %v97
    %100 = vbcast.lane.b32.xlu0 %v98, 256
    %v101 = vpop.permute.xlu0 %100
    %v102 = vmul.f32 %v35, %v52
    %v103 = vmul.f32 %v36, %v59
    %v104 = vmul.f32 %v37, %v66
    %v105 = vmul.f32 %v38, %v73
    %v106 = vmul.f32 %v39, %v80
    %v107 = vmul.f32 %v40, %v87
    %v108 = vmul.f32 %v41, %v94
    %v109 = vmul.f32 %v42, %v101
    %vm110 = vcmask 261120
    %v111 = vsel %vm110, %v102, 0.0
    %v112 = vrot.slane %v111, 4
    %v113 = vadd.f32 %v111, %v112
    %v114 = vrot.slane %v113, 2
    %v115 = vadd.f32 %v113, %v114
    %v116 = vrot.slane %v115, 1
    %v117 = vadd.f32 %v115, %v116
    %v118 = vsel %vm110, %v103, 0.0
    %v119 = vrot.slane %v118, 4
    %v120 = vadd.f32 %v118, %v119
    %v121 = vrot.slane %v120, 2
    %v122 = vadd.f32 %v120, %v121
    %v123 = vrot.slane %v122, 1
    %v124 = vadd.f32 %v122, %v123
    %v125 = vsel %vm110, %v104, 0.0
    %v126 = vrot.slane %v125, 4
    %v127 = vadd.f32 %v125, %v126
    %v128 = vrot.slane %v127, 2
    %v129 = vadd.f32 %v127, %v128
    %v130 = vrot.slane %v129, 1
    %v131 = vadd.f32 %v129, %v130
    %v132 = vsel %vm110, %v105, 0.0
    %v133 = vrot.slane %v132, 4
    %v134 = vadd.f32 %v132, %v133
    %v135 = vrot.slane %v134, 2
    %v136 = vadd.f32 %v134, %v135
    %v137 = vrot.slane %v136, 1
    %v138 = vadd.f32 %v136, %v137
    %v139 = vsel %vm110, %v106, 0.0
    %v140 = vrot.slane %v139, 4
    %v141 = vadd.f32 %v139, %v140
    %v142 = vrot.slane %v141, 2
    %v143 = vadd.f32 %v141, %v142
    %v144 = vrot.slane %v143, 1
    %v145 = vadd.f32 %v143, %v144
    %v146 = vsel %vm110, %v107, 0.0
    %v147 = vrot.slane %v146, 4
    %v148 = vadd.f32 %v146, %v147
    %v149 = vrot.slane %v148, 2
    %v150 = vadd.f32 %v148, %v149
    %v151 = vrot.slane %v150, 1
    %v152 = vadd.f32 %v150, %v151
    %v153 = vsel %vm110, %v108, 0.0
    %v154 = vrot.slane %v153, 4
    %v155 = vadd.f32 %v153, %v154
    %v156 = vrot.slane %v155, 2
    %v157 = vadd.f32 %v155, %v156
    %v158 = vrot.slane %v157, 1
    %v159 = vadd.f32 %v157, %v158
    %v160 = vsel %vm110, %v109, 0.0
    %v161 = vrot.slane %v160, 4
    %v162 = vadd.f32 %v160, %v161
    %v163 = vrot.slane %v162, 2
    %v164 = vadd.f32 %v162, %v163
    %v165 = vrot.slane %v164, 1
    %v166 = vadd.f32 %v164, %v165
    %vm175 = vcmask 1041409
    %v176 = vsel %vm175, %v124, %v117
    %vm177 = vcmask 1042434
    %v178 = vsel %vm177, %v131, %v176
    %vm179 = vcmask 1043459
    %v180 = vsel %vm179, %v138, %v178
    %vm181 = vcmask 1044484
    %v182 = vsel %vm181, %v145, %v180
    %vm183 = vcmask 1045509
    %v184 = vsel %vm183, %v152, %v182
    %vm185 = vcmask 1046534
    %v186 = vsel %vm185, %v159, %v184
    %vm187 = vcmask 1047559
    %v188 = vsel %vm187, %v166, %v186
    %v190 = vadd.f32 %v45, %v188
    %191 = vst.msk [vmem:[#allocation5] sm:$0xff] %vm110, %v190
    // Predicated region
    $region22: #{tpu_custom_call.1} parent=1 // pred_check
      %p192 = pneg %p29
    $region23: #{tpu_custom_call.1} parent=1 // pred_check_branch
      %194 = sbr.rel (%p192) target = $region25
    $region24: #{tpu_custom_call.1} parent=1 // pred_region
      %v195 = vld [vmem:[#allocation5] sm:$0xff]
      %v196 = vld [vmem:[%s2] sm:$0xff]
      %198 = vset.pattern.permute.xlu0 0
      %199 = vperm.xlu0 %198, %v196
      %v200 = vpop.permute.xlu0 %199
      %v202 = vrcp.pop %v200
      %v203 = vmul.f32 %v195, %v202
      %204 = vst.msk [vmem:[#allocation5] sm:$0xff] %vm110, %v203
    $region25: #{tpu_custom_call.1} parent=1 // pred_fallthru
      _
    // Predicated region
    $region26: #{tpu_custom_call.1} parent=1 // pred_check
      _
    $region27: #{tpu_custom_call.1} parent=1 // pred_check_branch
      %206 = sbr.rel (0) target = $region29
    $region28: #{tpu_custom_call.1} parent=1 // pred_region
      %s208 = ssub.s32 128, 128
      %209 = vsyncadd [#allocation4], %s208
      %s211 = sshll.u32 [#allocation5], 4
      %s212 = int_to_ptr.vmem [resolvable:$true] %s211
      %214 = dma.vmem_to_hbm [thread:$0]  %s212, 128, %s3, [#allocation4]
    $region29: #{tpu_custom_call.1} parent=1 // pred_fallthru
      _
    // Predicated region
    $region30: #{tpu_custom_call.1} parent=1 // pred_check
      _
    $region31: #{tpu_custom_call.1} parent=1 // pred_check_branch
      %216 = sbr.rel (0) target = $region33
    $region32: #{tpu_custom_call.1} parent=1 // pred_region
      %217 = dma.done [#allocation4], 128
    $region33: #{tpu_custom_call.1} parent=1 // pred_fallthru
      _
    %218 = vsyncpa [#allocation3], 1
    %219 = vsyncpa [#allocation4], 1

</llo_original>
